<compile_context>
chip_gen: v5e
topology: v5e:2x2
jax: 0.10.0
libtpu: 0.0.40
codegen_flags: <defaults>
</compile_context>

<pallas_src>
import functools

import jax
import jax.numpy as jnp
from jax.experimental import pallas as pl
from jax.experimental.pallas import tpu as pltpu


def _vrp_kernel(temp_ref, x_ref, w_ref, b_ref, u_ref, o_ref):
    # ---- Linear layer: logits = x @ W + b (MXU, f32 accumulate) ----
    logits = jnp.dot(
        x_ref[...], w_ref[...], preferred_element_type=jnp.float32
    ) + b_ref[...]

    # ---- Gumbel noise from streamed-in uniforms (torch.rand_like semantics) ----
    u = u_ref[...]
    gumbel = -jnp.log(-jnp.log(u + 1e-10) + 1e-10)

    # ---- temperature: one scalar reciprocal, then a VPU multiply ----
    inv_t = 1.0 / temp_ref[0]
    z = (logits + gumbel) * inv_t

    # ---- softmax over last axis (PyTorch dim=1) ----
    z = z - jnp.max(z, axis=-1, keepdims=True)
    e = jnp.exp(z)
    # Per-row reciprocal (EUP) + per-element VPU multiply instead of divides.
    inv_l = pl.reciprocal(jnp.sum(e, axis=-1, keepdims=True), approx=True)
    o_ref[...] = (e * inv_l).astype(o_ref.dtype)


def _choose_block_b(batch, d_in, d_out,
                    vmem_budget_bytes=24 * 1024 * 1024,
                    max_block=1024):
    """Largest batch tile (multiple of 8) whose working set fits the budget.

    Budget covers: resident W + b, plus double-buffered x, noise and out
    tiles.  24 MiB leaves headroom on v7x's 64 MiB VMEM as well as
    v5e/v6e's 128 MiB.
    """
    if batch <= 8:
        return batch  # full-dim block is always legal
    tb = min(max_block, (batch // 8) * 8)

    def working_set(t):
        resident = 4 * (d_in * d_out + d_out)       # W + b (resident)
        streamed = 2 * 4 * t * (d_in + 2 * d_out)   # x, u, out (double-buffered)
        return resident + streamed

    while tb > 8 and working_set(tb) > vmem_budget_bytes:
        tb = max(8, (tb // 2) // 8 * 8)
    return tb


@functools.partial(jax.jit, static_argnames=())
def vrp_model_forward(x, w, b, temperature, noise_key):
    """x: [B, D_in] f32, w: [D_in, D_out] f32 (pre-transposed), b: [1, D_out] f32."""
    B, D_in = x.shape
    D_out = w.shape[1]

    # Uniform noise in [0, 1), like torch.rand_like(logits).
    u = jax.random.uniform(noise_key, (B, D_out), dtype=jnp.float32)

    # ---- batch tiling ----
    TB = _choose_block_b(B, D_in, D_out)
    num_tiles = pl.cdiv(B, TB)
    B_pad = num_tiles * TB
    if B_pad != B:
        x = jnp.pad(x, ((0, B_pad - B), (0, 0)))
        u = jnp.pad(u, ((0, B_pad - B), (0, 0)), constant_values=0.5)

    temp_arr = jnp.asarray(temperature, dtype=jnp.float32).reshape(1)

    # VMEM limit: ~2x the estimated working set, clamped to a safe range.
    resident = 4 * (D_in * D_out + D_out)
    streamed = 2 * 4 * TB * (D_in + 2 * D_out)
    vmem_limit = int(min(max(2 * (resident + streamed), 8 * 1024 * 1024),
                         48 * 1024 * 1024))

    grid_spec = pltpu.PrefetchScalarGridSpec(
        num_scalar_prefetch=0,
        grid=(num_tiles,),
        in_specs=[
            # temperature: tiny scalar, lives in SMEM for the whole kernel
            pl.BlockSpec(memory_space=pltpu.MemorySpace.SMEM),
            # x: streamed batch tiles
            pl.BlockSpec((TB, D_in), lambda i: (i, 0)),
            # W, b: constant block index -> resident in VMEM across steps
            pl.BlockSpec((D_in, D_out), lambda i: (0, 0)),
            pl.BlockSpec((1, D_out), lambda i: (0, 0)),
            # uniform noise: streamed batch tiles
            pl.BlockSpec((TB, D_out), lambda i: (i, 0)),
        ],
        out_specs=pl.BlockSpec((TB, D_out), lambda i: (i, 0)),
    )

    out = pl.pallas_call(
        _vrp_kernel,
        out_shape=jax.ShapeDtypeStruct((B_pad, D_out), jnp.float32),
        grid_spec=grid_spec,
        compiler_params=pltpu.CompilerParams(
            # batch tiles are independent -> shard across TCs on v7x
            dimension_semantics=("parallel",),
            vmem_limit_bytes=vmem_limit,
        ),
    )(temp_arr, x, w, b, u)

    return out[:B] if B_pad != B else out


if __name__ == "__main__":
    # Small shapes consistent with the module: batch=8, input_dim=32, output_dim=128.
    # TODO(synk): if D_out is ever not a multiple of 128, pad it in the wrapper
    # (with -inf logits) to keep the output lane-dense.
    B, D_IN, D_OUT = 8, 32, 128
    temperature = 1.0

    key = jax.random.PRNGKey(0)
    kx, kw, kb, kn = jax.random.split(key, 4)

    x = jax.random.normal(kx, (B, D_IN), dtype=jnp.float32)

    # Deterministic parameter init (mimics nn.Linear's uniform(-1/sqrt(fan_in), ...)).
    bound = 1.0 / jnp.sqrt(jnp.float32(D_IN))
    # PyTorch stores weight as [out, in]; we store its transpose [in, out].
    w = jax.random.uniform(kw, (D_IN, D_OUT), jnp.float32, -bound, bound)
    b = jax.random.uniform(kb, (1, D_OUT), jnp.float32, -bound, bound)

    out = vrp_model_forward(x, w, b, temperature, kn)
    out = jax.block_until_ready(out)

    # Sanity: rows are valid probability distributions.
    # (tolerance accounts for the approximate reciprocal in the normalization)
    row_sums = jnp.sum(out, axis=-1)
    assert out.shape == (B, D_OUT)
    assert bool(jnp.all(jnp.abs(row_sums - 1.0) < 1e-2))
    assert bool(jnp.all(out >= 0.0))
    assert bool(jnp.all(out <= 1.0))

    print("KERNEL_OK")
</pallas_src>

<mosaic_0001>
module attributes {stable_mosaic.version = 11 : i64} {
  func.func @_vrp_kernel(%arg0: i32, %arg1: memref<1xf32, #tpu.memory_space<smem>>, %arg2: memref<8x32xf32, #tpu.memory_space<vmem>>, %arg3: memref<32x128xf32, #tpu.memory_space<vmem>>, %arg4: memref<1x128xf32, #tpu.memory_space<vmem>>, %arg5: memref<8x128xf32, #tpu.memory_space<vmem>>, %arg6: memref<8x128xf32, #tpu.memory_space<vmem>>) attributes {dimension_semantics = [#tpu.dimension_semantics<parallel>], iteration_bounds = array<i64: 1>, scalar_prefetch = 0 : i64, scratch_operands = 0 : i64, tpu.core_type = #tpu.core_type<tc>, window_params = [{transform_indices = @transform_0, window_bounds = array<i64: 1>}, {transform_indices = @transform_1, window_bounds = array<i64: 8, 32>}, {pipeline_mode = #tpu.pipeline_mode<synchronous>, transform_indices = @transform_2, window_bounds = array<i64: 32, 128>}, {pipeline_mode = #tpu.pipeline_mode<synchronous>, transform_indices = @transform_3, window_bounds = array<i64: 1, 128>}, {transform_indices = @transform_4, window_bounds = array<i64: 8, 128>}, {transform_indices = @transform_5, window_bounds = array<i64: 8, 128>}]} {
    %c0 = arith.constant 0 : index
    %c0_0 = arith.constant 0 : index
    %0 = vector.load %arg2[%c0, %c0_0] : memref<8x32xf32, #tpu.memory_space<vmem>>, vector<8x32xf32>
    %c0_1 = arith.constant 0 : index
    %c0_2 = arith.constant 0 : index
    %1 = vector.load %arg3[%c0_1, %c0_2] : memref<32x128xf32, #tpu.memory_space<vmem>>, vector<32x128xf32>
    %cst = arith.constant dense<0.000000e+00> : vector<8x128xf32>
    %2 = tpu.matmul %0, %1, %cst {dimension_numbers = #tpu.dot_dimension_numbers<[1], [0], [0], [1], [0, 0, 1, 1], [], []>} : vector<8x32xf32>, vector<32x128xf32>, vector<8x128xf32> -> vector<8x128xf32>
    %c0_3 = arith.constant 0 : index
    %c0_4 = arith.constant 0 : index
    %3 = vector.load %arg4[%c0_3, %c0_4] : memref<1x128xf32, #tpu.memory_space<vmem>>, vector<1x128xf32>
    %4 = vector.broadcast %3 : vector<1x128xf32> to vector<8x128xf32>
    %5 = arith.addf %2, %4 : vector<8x128xf32>
    %c0_5 = arith.constant 0 : index
    %c0_6 = arith.constant 0 : index
    %6 = vector.load %arg5[%c0_5, %c0_6] : memref<8x128xf32, #tpu.memory_space<vmem>>, vector<8x128xf32>
    %cst_7 = arith.constant 1.000000e-10 : f32
    %7 = vector.broadcast %cst_7 : f32 to vector<8x128xf32>
    %8 = arith.addf %6, %7 : vector<8x128xf32>
    %9 = math.log %8 : vector<8x128xf32>
    %cst_8 = arith.constant 0.000000e+00 : f32
    %10 = vector.broadcast %cst_8 : f32 to vector<8x128xf32>
    %11 = arith.subf %10, %9 : vector<8x128xf32>
    %cst_9 = arith.constant 1.000000e-10 : f32
    %12 = vector.broadcast %cst_9 : f32 to vector<8x128xf32>
    %13 = arith.addf %11, %12 : vector<8x128xf32>
    %14 = math.log %13 : vector<8x128xf32>
    %cst_10 = arith.constant 0.000000e+00 : f32
    %15 = vector.broadcast %cst_10 : f32 to vector<8x128xf32>
    %16 = arith.subf %15, %14 : vector<8x128xf32>
    %c0_11 = arith.constant 0 : index
    %17 = memref.load %arg1[%c0_11] : memref<1xf32, #tpu.memory_space<smem>>
    %cst_12 = arith.constant 1.000000e+00 : f32
    %18 = arith.divf %cst_12, %17 : f32
    %19 = arith.addf %5, %16 : vector<8x128xf32>
    %20 = vector.broadcast %18 : f32 to vector<8x128xf32>
    %21 = arith.mulf %19, %20 : vector<8x128xf32>
    %cst_13 = arith.constant dense<0xFF800000> : vector<8xf32>
    %22 = vector.multi_reduction <maximumf>, %21, %cst_13 [1] : vector<8x128xf32> to vector<8xf32>
    %23 = vector.shape_cast %22 : vector<8xf32> to vector<8x1xf32>
    %24 = vector.broadcast %23 : vector<8x1xf32> to vector<8x128xf32>
    %25 = arith.subf %21, %24 : vector<8x128xf32>
    %26 = math.exp %25 : vector<8x128xf32>
    %cst_14 = arith.constant dense<0.000000e+00> : vector<8xf32>
    %27 = vector.multi_reduction <add>, %26, %cst_14 [1] : vector<8x128xf32> to vector<8xf32>
    %28 = vector.shape_cast %27 : vector<8xf32> to vector<8x1xf32>
    %29 = tpu.reciprocal %28 {approx = true} : vector<8x1xf32> -> vector<8x1xf32>
    %30 = vector.broadcast %29 : vector<8x1xf32> to vector<8x128xf32>
    %31 = arith.mulf %26, %30 : vector<8x128xf32>
    %c0_15 = arith.constant 0 : index
    %c0_16 = arith.constant 0 : index
    %32 = vector.load %arg6[%c0_15, %c0_16] : memref<8x128xf32, #tpu.memory_space<vmem>>, vector<8x128xf32>
    tpu.vector_store %arg6[%c0_15, %c0_16], %31 {strides = array<i32>} : memref<8x128xf32, #tpu.memory_space<vmem>>, vector<8x128xf32>,
    return
  }
  func.func @transform_0(%arg0: i32) -> i32 {
    %c0_i32 = arith.constant 0 : i32
    %c0_i32_0 = arith.constant 0 : i32
    return %c0_i32 : i32
  }
  func.func @transform_1(%arg0: i32) -> (i32, i32) {
    %c0_i32 = arith.constant 0 : i32
    %c0_i32_0 = arith.constant 0 : i32
    return %arg0, %c0_i32 : i32, i32
  }
  func.func @transform_2(%arg0: i32) -> (i32, i32) {
    %c0_i32 = arith.constant 0 : i32
    %c0_i32_0 = arith.constant 0 : i32
    %c0_i32_1 = arith.constant 0 : i32
    return %c0_i32, %c0_i32_0 : i32, i32
  }
  func.func @transform_3(%arg0: i32) -> (i32, i32) {
    %c0_i32 = arith.constant 0 : i32
    %c0_i32_0 = arith.constant 0 : i32
    %c0_i32_1 = arith.constant 0 : i32
    return %c0_i32, %c0_i32_0 : i32, i32
  }
  func.func @transform_4(%arg0: i32) -> (i32, i32) {
    %c0_i32 = arith.constant 0 : i32
    %c0_i32_0 = arith.constant 0 : i32
    return %arg0, %c0_i32 : i32, i32
  }
  func.func @transform_5(%arg0: i32) -> (i32, i32) {
    %c0_i32 = arith.constant 0 : i32
    %c0_i32_0 = arith.constant 0 : i32
    return %arg0, %c0_i32 : i32, i32
  }
}

</mosaic_0001>

<llo_original>
// kernel: vrp_model_forward.1
$region0: #{vrp_model_forward.1}
  #allocation0 [shape = 'u32[]', space=smem, size = 0x4, offset = 0x4, fixed_abs, tag = 'smem constant byte address 0x4 - core index']
  #allocation1 [shape = 'u32[72,128]{1,0:T(1,128)}', space=vmem, size = 0x9000, scoped, tag = 'internal scratch']
  #allocation2 [shape = 'f32[1]{0:T(128)S(6)}', space=smem, size = 0x200, scoped, tag = 'scoped memory for vrp_model_forward.1']
  %s0 = inlined_call_operand.<no memory space> [shape: f32[1], index: 0, kind: input, shape index: {}]
  %s1 = inlined_call_operand.vmem [shape: f32[8,32], index: 1, kind: input, shape index: {}]
  %s2 = inlined_call_operand.hbm [shape: f32[32,128], index: 2, kind: input, shape index: {}]
  %s3 = inlined_call_operand.vmem [shape: f32[1,128], index: 3, kind: input, shape index: {}]
  %s4 = inlined_call_operand.vmem [shape: f32[8,128], index: 4, kind: input, shape index: {}]
  %s5 = inlined_call_operand.hbm [shape: f32[8,128], index: 5, kind: output, shape index: {}]
  %s6 = sld [smem:[#allocation0]]
  $region34: #{vrp_model_forward.1} parent=0
    _
  %s8 = ssub.s32 1, %s6
  %s9 = scalar_select 0, %s8, %s6
  %10 = sst [smem:[#allocation2]] %s0
  $region1: #{vrp_model_forward.1} parent=0
    #allocation3 [shape = 'u8[16384]{0}', space=vmem, size = 0x4000, scoped, tag = 'input window, operand 2, single buffered']
    #allocation4 [shape = 's32[1]{0}', space=sflag, size = 0x4, scoped, tag = 'scoped memory for vrp_model_forward.1']
    #allocation5 [shape = 's32[1]{0}', space=sflag, size = 0x4, scoped, tag = 'scoped memory for vrp_model_forward.1']
    #allocation6 [shape = 'u8[4096]{0}', space=vmem, size = 0x1000, scoped, tag = 'output window, operand 0, single buffered']
    %11 = vsyncpa [#allocation4], 0
    %12 = vsyncpa [#allocation5], 0
    // Predicated region
    $region2: #{vrp_model_forward.1} parent=1 // pred_check
      _
    $region3: #{vrp_model_forward.1} parent=1 // pred_check_branch
      %14 = sbr.rel (0) target = $region5
    $region4: #{vrp_model_forward.1} parent=1 // pred_region
      _
    $region5: #{vrp_model_forward.1} parent=1 // pred_fallthru
      _
    // Predicated region
    $region6: #{vrp_model_forward.1} parent=1 // pred_check
      _
    $region7: #{vrp_model_forward.1} parent=1 // pred_check_branch
      %16 = sbr.rel (0) target = $region9
    $region8: #{vrp_model_forward.1} parent=1 // pred_region
      _
    $region9: #{vrp_model_forward.1} parent=1 // pred_fallthru
      _
    // Predicated region
    $region10: #{vrp_model_forward.1} parent=1 // pred_check
      _
    $region11: #{vrp_model_forward.1} parent=1 // pred_check_branch
      %18 = sbr.rel (0) target = $region13
    $region12: #{vrp_model_forward.1} parent=1 // pred_region
      %20 = vsyncadd [#allocation4], 0
      %s21 = sshll.u32 %s2, 4
      %s22 = int_to_ptr.hbm [resolvable:$true] %s21
      %s23 = sshll.u32 [#allocation3], 4
      %s24 = int_to_ptr.vmem [resolvable:$true] %s23
      %29 = dma.hbm_to_vmem [thread:$0]  %s22, 512, %s24, [#allocation4], 128, 128, 8
    $region13: #{vrp_model_forward.1} parent=1 // pred_fallthru
      _
    // Predicated region
    $region14: #{vrp_model_forward.1} parent=1 // pred_check
      _
    $region15: #{vrp_model_forward.1} parent=1 // pred_check_branch
      %31 = sbr.rel (0) target = $region17
    $region16: #{vrp_model_forward.1} parent=1 // pred_region
      _
    $region17: #{vrp_model_forward.1} parent=1 // pred_fallthru
      _
    // Predicated region
    $region18: #{vrp_model_forward.1} parent=1 // pred_check
      _
    $region19: #{vrp_model_forward.1} parent=1 // pred_check_branch
      %33 = sbr.rel (0) target = $region21
    $region20: #{vrp_model_forward.1} parent=1 // pred_region
      _
    $region21: #{vrp_model_forward.1} parent=1 // pred_fallthru
      _
    // Predicated region
    $region22: #{vrp_model_forward.1} parent=1 // pred_check
      _
    $region23: #{vrp_model_forward.1} parent=1 // pred_check_branch
      %35 = sbr.rel (0) target = $region25
    $region24: #{vrp_model_forward.1} parent=1 // pred_region
      %37 = dma.done [#allocation4], 512
    $region25: #{vrp_model_forward.1} parent=1 // pred_fallthru
      _
    %v38 = vld [vmem:[%s1] sm:$0xff]
    %v39 = vld [vmem:[#allocation3] sm:$0xff]
    %v40 = vld [vmem:[#allocation3 + $0x8] sm:$0xff]
    %v41 = vld [vmem:[#allocation3 + $0x10] sm:$0xff]
    %v42 = vld [vmem:[#allocation3 + $0x18] sm:$0xff]
    %v43 = vld [vmem:[%s3] sm:$0x1]
    %v45 = vperm.slane %v43, 0
    %vm47 = vcmask 261120
    %v49 = vsel %vm47, %v38, 0
    %51 = vmatpush.msra.mxu0 0.0
    %52 = vmatpush.msra.mxu0 0.0
    %53 = vmatpush.msra.mxu0 0.0
    %54 = vmatpush.msra.mxu0 0.0
    %55 = vmatpush.msra.mxu0 0.0
    %56 = vmatpush.msra.mxu0 0.0
    %57 = vmatpush.msra.mxu0 0.0
    %58 = vmatpush.msra.mxu0 0.0
    %59 = vmatpush.msra.mxu0 0.0
    %60 = vmatpush.msra.mxu0 0.0
    %61 = vmatpush.msra.mxu0 0.0
    %62 = vmatpush.msra.mxu0 0.0
    %63 = vmatpush.msra.mxu0 %v42
    %64 = vmatpush.msra.mxu0 %v41
    %65 = vmatpush.msra.mxu0 %v40
    %66 = vmatpush.msra.mxu0 %v39
    %67 = vmatmul.f32.gmra.mxu0 %v49
    %v68 = vpop.f32.mrf.mxu0
    %v69 = vadd.f32 %v45, %v68
    %70 = vdwg.mxu0
    %v71 = vld [vmem:[%s4] sm:$0xff]
    %v72 = vadd.f32 %v71, 1e-10
    %v73 = vlog2.pop %v72
    %v74 = vmul.f32 %v73, 0.6931472
    %v75 = vsub.f32 0.0, %v74
    %v76 = vadd.f32 %v75, 1e-10
    %v77 = vlog2.pop %v76
    %v78 = vmul.f32 %v77, 0.6931472
    %v79 = vsub.f32 0.0, %v78
    %s80 = sld [smem:[#allocation2]]
    %v81 = vstv %s80
    %v82 = vrcp.pop %v81
    %v83 = vmul.f32 %v81, %v82
    %v84 = vsub.f32 1.0, %v83
    %v85 = vmul.f32 %v82, %v84
    %v86 = vadd.f32 %v82, %v85
    %vm87 = vweird.f32 %v81
    %vm88 = vweird.f32 %v82
    %vm89 = vmor %vm87, %vm88
    %v90 = vsel %vm89, %v82, %v86
    %v91 = vand.u32 2147483647, %v81
    %vm92 = vcmp.eq.f32.partialorder %v91, 8.507059e+37
    %v93 = vand.u32 %v81, 2147483648
    %v94 = vor.u32 1.1754944e-38, %v93
    %v95 = vsel %vm92, %v94, %v90
    %s96 = vtos %v95
    %v97 = vadd.f32 %v69, %v79
    %v98 = vstv %s96
    %v99 = vmul.f32 %v97, %v98
    %100 = vmax.xlane.f32.xlu0 %v99
    %v101 = vpop.xlane.xlu0 %100
    %v102 = vsub.f32 %v99, %v101
    %v103 = vmul.f32 %v102, 1.442695
    %v104 = vpow.pop %v103
    %105 = vadd.xlane.f32.xlu0 %v104
    %v106 = vpop.xlane.xlu0 %105
    %v107 = vrcp.pop %v106
    %v108 = vmul.f32 %v104, %v107
    %109 = vst [vmem:[#allocation6] sm:$0xff] %v108
    // Predicated region
    $region26: #{vrp_model_forward.1} parent=1 // pred_check
      _
    $region27: #{vrp_model_forward.1} parent=1 // pred_check_branch
      %111 = sbr.rel (0) target = $region29
    $region28: #{vrp_model_forward.1} parent=1 // pred_region
      %113 = vsyncadd [#allocation5], 0
      %s115 = sshll.u32 [#allocation6], 4
      %s116 = int_to_ptr.vmem [resolvable:$true] %s115
      %s117 = sshll.u32 %s5, 4
      %s118 = int_to_ptr.hbm [resolvable:$true] %s117
      %120 = dma.vmem_to_hbm [thread:$0]  %s116, 128, %s118, [#allocation5]
    $region29: #{vrp_model_forward.1} parent=1 // pred_fallthru
      _
    // Predicated region
    $region30: #{vrp_model_forward.1} parent=1 // pred_check
      _
    $region31: #{vrp_model_forward.1} parent=1 // pred_check_branch
      %122 = sbr.rel (0) target = $region33
    $region32: #{vrp_model_forward.1} parent=1 // pred_region
      %124 = dma.done [#allocation5], 128
    $region33: #{vrp_model_forward.1} parent=1 // pred_fallthru
      _
    %125 = vsyncpa [#allocation4], 1
    %126 = vsyncpa [#allocation5], 1

</llo_original>
